<compile_context>
chip_gen: v7x
topology: tpu7x:2x2x1
jax: 0.10.0
libtpu: 0.0.40
codegen_flags: <defaults>
</compile_context>

<pallas_src>
import functools
import math

import jax
import jax.numpy as jnp
from jax import lax
from jax.experimental import pallas as pl
from jax.experimental.pallas import tpu as pltpu


def _round_up(x, m):
    return (x + m - 1) // m * m


def _vmem_capacity_bytes():
    try:
        return int(pltpu.get_tpu_info().vmem_capacity_bytes)
    except Exception:
        return 64 << 20  # conservative: v7x per-TC VMEM


# --------------------------------------------------------------------------
# Kernels
# --------------------------------------------------------------------------
def _single_step_kernel(x_ref, w_ref, b_ref, o_ref):
    """Whole K resident: one MXU pass, bias add, store."""
    x = x_ref[...].astype(w_ref.dtype)            # in-kernel cast (bf16 weights etc.)
    acc = jnp.dot(x, w_ref[...], preferred_element_type=jnp.float32)
    o_ref[...] = (acc + b_ref[...].astype(jnp.float32)).astype(o_ref.dtype)


def _ksplit_kernel_f32(x_ref, w_ref, b_ref, o_ref, *, tk, k_total):
    """K split across grid axis 2; f32 output accumulated in place."""
    k = pl.program_id(2)

    @pl.when(k == 0)
    def _():
        o_ref[...] = jnp.broadcast_to(b_ref[...].astype(jnp.float32), o_ref.shape)

    x = x_ref[...].astype(w_ref.dtype)
    w = w_ref[...]
    if k_total % tk != 0:
        # Zero the out-of-bounds K tail of the edge block so garbage (possibly
        # NaN) from OOB VMEM never reaches the accumulator.
        base = k * tk
        col = lax.broadcasted_iota(jnp.int32, x.shape, 1) + base
        x = jnp.where(col < k_total, x, jnp.zeros_like(x))
        row = lax.broadcasted_iota(jnp.int32, w.shape, 0) + base
        w = jnp.where(row < k_total, w, jnp.zeros_like(w))
    o_ref[...] += jnp.dot(x, w, preferred_element_type=jnp.float32)


def _ksplit_kernel_acc(x_ref, w_ref, b_ref, o_ref, acc_ref, *, tk, k_total):
    """K split; low-precision output via f32 scratch accumulator."""
    k = pl.program_id(2)

    @pl.when(k == 0)
    def _():
        acc_ref[...] = jnp.broadcast_to(b_ref[...].astype(jnp.float32), acc_ref.shape)

    x = x_ref[...].astype(w_ref.dtype)
    w = w_ref[...]
    if k_total % tk != 0:
        base = k * tk
        col = lax.broadcasted_iota(jnp.int32, x.shape, 1) + base
        x = jnp.where(col < k_total, x, jnp.zeros_like(x))
        row = lax.broadcasted_iota(jnp.int32, w.shape, 0) + base
        w = jnp.where(row < k_total, w, jnp.zeros_like(w))
    acc_ref[...] += jnp.dot(x, w, preferred_element_type=jnp.float32)

    @pl.when(k == pl.num_programs(2) - 1)
    def _():
        o_ref[...] = acc_ref[...].astype(o_ref.dtype)


# --------------------------------------------------------------------------
# Forward
# --------------------------------------------------------------------------
@functools.partial(jax.jit, static_argnames=("tm", "tn", "tk"))
def _affine_forward(x, w_kn, bias_row, *, tm=512, tn=512, tk=1024):
    """x: (..., K); w_kn: (K, N) pre-transposed weight; bias_row: (1, N)."""
    K, N = w_kn.shape
    assert x.shape[-1] == K, (x.shape, w_kn.shape)
    orig_shape = x.shape
    out_dtype = x.dtype
    M = math.prod(orig_shape[:-1]) if len(orig_shape) > 1 else 1
    x2 = x.reshape(M, K)

    xb = jnp.dtype(x2.dtype).itemsize
    wb = jnp.dtype(w_kn.dtype).itemsize
    ob = jnp.dtype(out_dtype).itemsize
    bb = jnp.dtype(bias_row.dtype).itemsize

    cap = _vmem_capacity_bytes()
    vmem_limit = int(cap * 0.8)       # above the 16/32 MiB scoped defaults
    budget = int(cap * 0.6)           # what we allow the tiles to occupy

    # ---- M tile -----------------------------------------------------------
    if M > tm:
        tm_eff = tm                                   # multiple of 8 by default
    elif M >= 256:
        tm_eff = _round_up((M + 1) // 2, 8)           # >=2 blocks for v7x megacore
    else:
        tm_eff = M                                    # full-dim block (always legal)

    # ---- path selection -----------------------------------------------------
    # Path 1: whole weight resident in VMEM -> 1-D grid over M, weight DMA'd once.
    resident_bytes = (2 * K * N * wb + 2 * N * bb
                      + 2 * tm_eff * K * xb + 2 * tm_eff * N * ob)
    if resident_bytes <= budget:
        grid = (pl.cdiv(M, tm_eff),)
        in_specs = [
            pl.BlockSpec((tm_eff, K), lambda i: (i, 0)),
            pl.BlockSpec((K, N), lambda i: (0, 0)),      # constant index -> no re-DMA
            pl.BlockSpec((1, N), lambda i: (0, 0)),
        ]
        out_spec = pl.BlockSpec((tm_eff, N), lambda i: (i, 0))
        kernel = _single_step_kernel
        scratch = []
        semantics = ("parallel",)
        bytes_accessed = M * K * xb + K * N * wb + N * bb + M * N * ob
    else:
        tn_eff = N if N <= tn else tn                    # tn is a multiple of 128
        grid_m = pl.cdiv(M, tm_eff)
        grid_n = pl.cdiv(N, tn_eff)
        singlek_bytes = (2 * tm_eff * K * xb + 2 * K * tn_eff * wb
                         + 2 * tn_eff * bb + 2 * tm_eff * tn_eff * ob)
        if singlek_bytes <= budget:
            # Path 2: whole K in one step, 2-D grid over (M, N).
            grid = (grid_m, grid_n)
            in_specs = [
                pl.BlockSpec((tm_eff, K), lambda i, j: (i, 0)),
                pl.BlockSpec((K, tn_eff), lambda i, j: (0, j)),
                pl.BlockSpec((1, tn_eff), lambda i, j: (0, j)),
            ]
            out_spec = pl.BlockSpec((tm_eff, tn_eff), lambda i, j: (i, j))
            kernel = _single_step_kernel
            scratch = []
            semantics = ("parallel", "parallel")
            bytes_accessed = (M * K * xb * grid_n + K * N * wb * grid_m
                              + N * bb * grid_m + M * N * ob)
        else:
            # Path 3: split the reduction axis (large layers only).
            out_is_f32 = jnp.dtype(out_dtype) == jnp.dtype(jnp.float32)
            acc_extra = 0 if out_is_f32 else tm_eff * tn_eff * 4
            tk_eff = min(max(128, (tk // 128) * 128), _round_up(K, 128))

            def _fits(t):
                return (2 * tm_eff * t * xb + 2 * t * tn_eff * wb
                        + 2 * tn_eff * bb + 2 * tm_eff * tn_eff * ob
                        + acc_extra) <= budget

            while tk_eff > 128 and not _fits(tk_eff):
                tk_eff -= 128
            # Prefer an exact divisor of K (removes the in-kernel tail mask),
            # but never shrink the K tile by more than 2x for it.
            for cand in range(tk_eff, 0, -128):
                if K % cand == 0:
                    if cand >= max(256, tk_eff // 2):
                        tk_eff = cand
                    break
            grid_k = pl.cdiv(K, tk_eff)
            grid = (grid_m, grid_n, grid_k)
            in_specs = [
                pl.BlockSpec((tm_eff, tk_eff), lambda i, j, k: (i, k)),
                pl.BlockSpec((tk_eff, tn_eff), lambda i, j, k: (k, j)),
                pl.BlockSpec((1, tn_eff), lambda i, j, k: (0, j)),
            ]
            out_spec = pl.BlockSpec((tm_eff, tn_eff), lambda i, j, k: (i, j))
            if out_is_f32:
                kernel = functools.partial(_ksplit_kernel_f32, tk=tk_eff, k_total=K)
                scratch = []
            else:
                kernel = functools.partial(_ksplit_kernel_acc, tk=tk_eff, k_total=K)
                scratch = [pltpu.VMEM((tm_eff, tn_eff), jnp.float32)]
            semantics = ("parallel", "parallel", "arbitrary")
            bytes_accessed = (M * K * xb * grid_n + K * N * wb * grid_m
                              + N * bb * grid_m + M * N * ob)

    cost = pl.CostEstimate(
        flops=2 * M * N * K, transcendentals=0, bytes_accessed=int(bytes_accessed)
    )

    out = pl.pallas_call(
        kernel,
        out_shape=jax.ShapeDtypeStruct((M, N), out_dtype),
        grid_spec=pltpu.PrefetchScalarGridSpec(
            num_scalar_prefetch=0,
            grid=grid,
            in_specs=in_specs,
            out_specs=out_spec,
            scratch_shapes=scratch,
        ),
        compiler_params=pltpu.CompilerParams(
            dimension_semantics=semantics,
            vmem_limit_bytes=vmem_limit,
        ),
        cost_estimate=cost,
    )(x2, w_kn, bias_row)

    return out.reshape(orig_shape[:-1] + (N,))


# --------------------------------------------------------------------------
# Parameter preparation (done ONCE per layer, outside the forward hot path)
# --------------------------------------------------------------------------
def prepare_affine_params(weight, bias, *, compute_dtype=None):
    """weight: (D_out, D_in) torch layout -> (D_in, D_out) MXU-friendly RHS.

    Optionally cast the weight to `compute_dtype` (e.g. jnp.bfloat16 on
    v6e/v7x); x is cast per-tile inside the kernel, accumulation stays f32.
    """
    w_kn = jnp.asarray(weight).T
    if compute_dtype is not None:
        w_kn = w_kn.astype(compute_dtype)
    bias_row = jnp.asarray(bias).reshape(1, -1)
    return w_kn, bias_row


class AffineTransform:
    """Pallas equivalent of the PyTorch AffineTransform module (nn.Linear fwd)."""

    def __init__(self, weight, bias, *, compute_dtype=None):
        self.w_kn, self.bias_row = prepare_affine_params(
            weight, bias, compute_dtype=compute_dtype
        )

    def __call__(self, x):
        return _affine_forward(x, self.w_kn, self.bias_row)


def affine_transform(x, weight, bias):
    """One-shot convenience wrapper (prepares params eagerly, then runs)."""
    w_kn, bias_row = prepare_affine_params(weight, bias)
    return _affine_forward(x, w_kn, bias_row)


# --------------------------------------------------------------------------
if __name__ == "__main__":
    key = jax.random.PRNGKey(0)

    # Small AffineTransform shapes: (batch, seq, input_dim) -> output_dim.
    batch, seq, input_dim, output_dim = 2, 8, 32, 48
    kx, kw, kb = jax.random.split(key, 3)
    bound = 1.0 / math.sqrt(input_dim)
    x = jax.random.normal(kx, (batch, seq, input_dim), dtype=jnp.float32)
    weight = jax.random.uniform(
        kw, (output_dim, input_dim), minval=-bound, maxval=bound, dtype=jnp.float32
    )
    bias = jax.random.uniform(
        kb, (output_dim,), minval=-bound, maxval=bound, dtype=jnp.float32
    )

    layer = AffineTransform(weight, bias)
    out = jax.block_until_ready(layer(x))
    ref = x @ weight.T + bias
    assert out.shape == (batch, seq, output_dim), out.shape
    assert jnp.allclose(out, ref, atol=1e-5, rtol=1e-5), float(
        jnp.max(jnp.abs(out - ref))
    )

    # FSMN-VAD-like dims: exercises the weight-resident path with multiple
    # M blocks and a partial M edge block (no padding anywhere).
    b2, s2, din2, dout2 = 2, 300, 400, 140
    k0, k1, k2 = jax.random.split(jax.random.PRNGKey(1), 3)
    bound2 = 1.0 / math.sqrt(din2)
    x_big = jax.random.normal(k0, (b2, s2, din2), dtype=jnp.float32)
    w_big = jax.random.uniform(
        k1, (dout2, din2), minval=-bound2, maxval=bound2, dtype=jnp.float32
    )
    b_big = jax.random.uniform(
        k2, (dout2,), minval=-bound2, maxval=bound2, dtype=jnp.float32
    )
    out_big = jax.block_until_ready(affine_transform(x_big, w_big, b_big))
    ref_big = x_big @ w_big.T + b_big
    assert out_big.shape == (b2, s2, dout2), out_big.shape
    assert jnp.allclose(out_big, ref_big, atol=1e-4, rtol=1e-4), float(
        jnp.max(jnp.abs(out_big - ref_big))
    )

    print("KERNEL_OK")
</pallas_src>

<mosaic_0001>
module attributes {stable_mosaic.version = 11 : i64} {
  func.func @_single_step_kernel(%arg0: i32, %arg1: memref<16x32xf32, #tpu.memory_space<vmem>>, %arg2: memref<32x48xf32, #tpu.memory_space<vmem>>, %arg3: memref<1x48xf32, #tpu.memory_space<vmem>>, %arg4: memref<16x48xf32, #tpu.memory_space<vmem>>) attributes {dimension_semantics = [#tpu.dimension_semantics<parallel>], iteration_bounds = array<i64: 1>, scalar_prefetch = 0 : i64, scratch_operands = 0 : i64, tpu.core_type = #tpu.core_type<tc>, window_params = [{transform_indices = @transform_0, window_bounds = array<i64: 16, 32>}, {pipeline_mode = #tpu.pipeline_mode<synchronous>, transform_indices = @transform_1, window_bounds = array<i64: 32, 48>}, {pipeline_mode = #tpu.pipeline_mode<synchronous>, transform_indices = @transform_2, window_bounds = array<i64: 1, 48>}, {transform_indices = @transform_3, window_bounds = array<i64: 16, 48>}]} {
    %c0 = arith.constant 0 : index
    %c0_0 = arith.constant 0 : index
    %0 = vector.load %arg1[%c0, %c0_0] : memref<16x32xf32, #tpu.memory_space<vmem>>, vector<16x32xf32>
    %c0_1 = arith.constant 0 : index
    %c0_2 = arith.constant 0 : index
    %1 = vector.load %arg2[%c0_1, %c0_2] : memref<32x48xf32, #tpu.memory_space<vmem>>, vector<32x48xf32>
    %cst = arith.constant dense<0.000000e+00> : vector<16x48xf32>
    %2 = tpu.matmul %0, %1, %cst {dimension_numbers = #tpu.dot_dimension_numbers<[1], [0], [0], [1], [0, 0, 1, 1], [], []>} : vector<16x32xf32>, vector<32x48xf32>, vector<16x48xf32> -> vector<16x48xf32>
    %c0_3 = arith.constant 0 : index
    %c0_4 = arith.constant 0 : index
    %3 = vector.load %arg3[%c0_3, %c0_4] : memref<1x48xf32, #tpu.memory_space<vmem>>, vector<1x48xf32>
    %4 = vector.broadcast %3 : vector<1x48xf32> to vector<16x48xf32>
    %5 = arith.addf %2, %4 : vector<16x48xf32>
    %c0_5 = arith.constant 0 : index
    %c0_6 = arith.constant 0 : index
    %6 = vector.load %arg4[%c0_5, %c0_6] : memref<16x48xf32, #tpu.memory_space<vmem>>, vector<16x48xf32>
    tpu.vector_store %arg4[%c0_5, %c0_6], %5 {strides = array<i32>} : memref<16x48xf32, #tpu.memory_space<vmem>>, vector<16x48xf32>,
    return
  }
  func.func @transform_0(%arg0: i32) -> (i32, i32) {
    %c0_i32 = arith.constant 0 : i32
    %c0_i32_0 = arith.constant 0 : i32
    return %arg0, %c0_i32 : i32, i32
  }
  func.func @transform_1(%arg0: i32) -> (i32, i32) {
    %c0_i32 = arith.constant 0 : i32
    %c0_i32_0 = arith.constant 0 : i32
    %c0_i32_1 = arith.constant 0 : i32
    return %c0_i32, %c0_i32_0 : i32, i32
  }
  func.func @transform_2(%arg0: i32) -> (i32, i32) {
    %c0_i32 = arith.constant 0 : i32
    %c0_i32_0 = arith.constant 0 : i32
    %c0_i32_1 = arith.constant 0 : i32
    return %c0_i32, %c0_i32_0 : i32, i32
  }
  func.func @transform_3(%arg0: i32) -> (i32, i32) {
    %c0_i32 = arith.constant 0 : i32
    %c0_i32_0 = arith.constant 0 : i32
    return %arg0, %c0_i32 : i32, i32
  }
}

</mosaic_0001>

<llo_original>
// kernel: _affine_forward.1
$region0: #{_affine_forward.1}
  #allocation0 [shape = 'u32[]', space=smem, size = 0x4, offset = 0x4, fixed_abs, tag = 'smem constant byte address 0x4 - core index']
  #allocation1 [shape = 'u32[144,128]{1,0:T(1,128)}', space=vmem, size = 0x12000, scoped, tag = 'internal scratch']
  %s0 = inlined_call_operand.hbm [shape: f32[16,32], index: 0, kind: input, shape index: {}]
  %s1 = inlined_call_operand.hbm [shape: f32[32,48], index: 1, kind: input, shape index: {}]
  %s2 = inlined_call_operand.vmem [shape: f32[1,48], index: 2, kind: input, shape index: {}]
  %s3 = inlined_call_operand.hbm [shape: f32[16,48], index: 3, kind: output, shape index: {}]
  %s4 = sld [smem:[#allocation0]]
  $region30: #{_affine_forward.1} parent=0
    _
  %s6 = ssub.s32 1, %s4
  %s7 = scalar_select 0, %s6, %s4
  $region1: #{_affine_forward.1} parent=0
    #allocation2 [shape = 'u8[8192]{0}', space=vmem, size = 0x2000, scoped, tag = 'input window, operand 0, single buffered']
    #allocation3 [shape = 's32[1]{0}', space=sflag, size = 0x4, scoped, tag = 'scoped memory for _affine_forward.1']
    #allocation4 [shape = 's32[1]{0}', space=sflag, size = 0x4, scoped, tag = 'scoped memory for _affine_forward.1']
    #allocation5 [shape = 'u8[16384]{0}', space=vmem, size = 0x4000, scoped, tag = 'input window, operand 1, single buffered']
    #allocation6 [shape = 's32[1]{0}', space=sflag, size = 0x4, scoped, tag = 'scoped memory for _affine_forward.1']
    #allocation7 [shape = 'u8[8192]{0}', space=vmem, size = 0x2000, scoped, tag = 'output window, operand 0, single buffered']
    %8 = vsyncpa [#allocation3], 0
    %9 = vsyncpa [#allocation6], 0
    %10 = vsyncpa [#allocation4], 0
    // Predicated region
    $region2: #{_affine_forward.1} parent=1 // pred_check
      _
    $region3: #{_affine_forward.1} parent=1 // pred_check_branch
      %12 = sbr.rel (0) target = $region5
    $region4: #{_affine_forward.1} parent=1 // pred_region
      %s14 = ssub.s32 256, 256
      %15 = vsyncadd [#allocation3], %s14
      %s16 = sshll.u32 [#allocation2], 4
      %s17 = int_to_ptr.vmem [resolvable:$true] %s16
      %22 = dma.hbm_to_vmem [thread:$0]  %s0, 256, %s17, [#allocation3], 128, 128, 8
    $region5: #{_affine_forward.1} parent=1 // pred_fallthru
      _
    // Predicated region
    $region6: #{_affine_forward.1} parent=1 // pred_check
      _
    $region7: #{_affine_forward.1} parent=1 // pred_check_branch
      %24 = sbr.rel (0) target = $region9
    $region8: #{_affine_forward.1} parent=1 // pred_region
      %s26 = ssub.s32 512, 512
      %27 = vsyncadd [#allocation6], %s26
      %s28 = sshll.u32 [#allocation5], 4
      %s29 = int_to_ptr.vmem [resolvable:$true] %s28
      %34 = dma.hbm_to_vmem [thread:$0]  %s1, 512, %s29, [#allocation6], 128, 128, 8
    $region9: #{_affine_forward.1} parent=1 // pred_fallthru
      _
    // Predicated region
    $region10: #{_affine_forward.1} parent=1 // pred_check
      _
    $region11: #{_affine_forward.1} parent=1 // pred_check_branch
      %36 = sbr.rel (0) target = $region13
    $region12: #{_affine_forward.1} parent=1 // pred_region
      _
    $region13: #{_affine_forward.1} parent=1 // pred_fallthru
      _
    // Predicated region
    $region14: #{_affine_forward.1} parent=1 // pred_check
      _
    $region15: #{_affine_forward.1} parent=1 // pred_check_branch
      %38 = sbr.rel (0) target = $region17
    $region16: #{_affine_forward.1} parent=1 // pred_region
      %39 = dma.done [#allocation3], 256
    $region17: #{_affine_forward.1} parent=1 // pred_fallthru
      _
    // Predicated region
    $region18: #{_affine_forward.1} parent=1 // pred_check
      _
    $region19: #{_affine_forward.1} parent=1 // pred_check_branch
      %41 = sbr.rel (0) target = $region21
    $region20: #{_affine_forward.1} parent=1 // pred_region
      %42 = dma.done [#allocation6], 512
    $region21: #{_affine_forward.1} parent=1 // pred_fallthru
      _
    %v43 = vld [vmem:[#allocation2] sm:$0xff]
    %v44 = vld [vmem:[#allocation2 + $0x8] sm:$0xff]
    %v45 = vld [vmem:[#allocation5] sm:$0xff]
    %v46 = vld [vmem:[#allocation5 + $0x8] sm:$0xff]
    %v47 = vld [vmem:[#allocation5 + $0x10] sm:$0xff]
    %v48 = vld [vmem:[#allocation5 + $0x18] sm:$0xff]
    %v49 = vld [vmem:[%s2] sm:$0x1]
    %v51 = vlaneseq
    %v52 = vshrl.u32 %v51, 7
    %v53 = vsub.s32 0, %v52
    %v54 = vrot.slane %v49, %v53
    %vm56 = vcmask 261120
    %v58 = vsel %vm56, %v43, 0
    %v61 = vsel %vm56, %v44, 0
    %63 = vmatprep.subr.mxu0 0.0
    %64 = vmatpush1.msra.mxu0 %v45
    %65 = vmatprep.subr.mxu0 0.0
    %66 = vmatpush1.msra.mxu0 %v46
    %67 = vmatprep.subr.mxu0 0.0
    %68 = vmatpush1.msra.mxu0 %v47
    %69 = vmatprep.subr.mxu0 0.0
    %70 = vmatpush1.msra.mxu0 %v48
    %71 = vmatprep.subr.mxu0 0.0
    %72 = vmatpush1.msra.mxu0 0.0
    %73 = vmatprep.subr.mxu0 0.0
    %74 = vmatpush1.msra.mxu0 0.0
    %75 = vmatprep.subr.mxu0 0.0
    %76 = vmatpush1.msra.mxu0 0.0
    %77 = vmatprep.subr.mxu0 0.0
    %78 = vmatpush1.msra.mxu0 0.0
    %79 = vmatprep.subr.mxu0 0.0
    %80 = vmatpush1.msra.mxu0 0.0
    %81 = vmatprep.subr.mxu0 0.0
    %82 = vmatpush1.msra.mxu0 0.0
    %83 = vmatprep.subr.mxu0 0.0
    %84 = vmatpush1.msra.mxu0 0.0
    %85 = vmatprep.subr.mxu0 0.0
    %86 = vmatpush1.msra.mxu0 0.0
    %87 = vmatprep.subr.mxu0 0.0
    %88 = vmatpush1.msra.mxu0 0.0
    %89 = vmatprep.subr.mxu0 0.0
    %90 = vmatpush1.msra.mxu0 0.0
    %91 = vmatprep.subr.mxu0 0.0
    %92 = vmatpush1.msra.mxu0 0.0
    %93 = vmatprep.subr.mxu0 0.0
    %94 = vmatpush1.msra.mxu0 0.0
    %95 = vmatprep.subr.mxu0 0.0
    %96 = vmatpush1.msra.mxu0 0.0
    %97 = vmatprep.subr.mxu0 0.0
    %98 = vmatpush1.msra.mxu0 0.0
    %99 = vmatprep.subr.mxu0 0.0
    %100 = vmatpush1.msra.mxu0 0.0
    %101 = vmatprep.subr.mxu0 0.0
    %102 = vmatpush1.msra.mxu0 0.0
    %103 = vmatprep.subr.mxu0 0.0
    %104 = vmatpush1.msra.mxu0 0.0
    %105 = vmatprep.subr.mxu0 0.0
    %106 = vmatpush1.msra.mxu0 0.0
    %107 = vmatprep.subr.mxu0 0.0
    %108 = vmatpush1.msra.mxu0 0.0
    %109 = vmatprep.subr.mxu0 0.0
    %110 = vmatpush1.msra.mxu0 0.0
    %111 = vmatprep.subr.mxu0 0.0
    %112 = vmatpush1.msra.mxu0 0.0
    %113 = vmatprep.subr.mxu0 0.0
    %114 = vmatpush1.msra.mxu0 0.0
    %115 = vmatprep.subr.mxu0 0.0
    %116 = vmatpush1.msra.mxu0 0.0
    %117 = vmatprep.subr.mxu0 0.0
    %118 = vmatpush1.msra.mxu0 0.0
    %119 = vmatprep.subr.mxu0 0.0
    %120 = vmatpush1.msra.mxu0 0.0
    %121 = vmatprep.subr.mxu0 0.0
    %122 = vmatpush1.msra.mxu0 0.0
    %123 = vmatprep.subr.mxu0 0.0
    %124 = vmatpush1.msra.mxu0 0.0
    %125 = vmatprep.subr.mxu0 0.0
    %126 = vmatpush1.msra.mxu0 0.0
    %127 = vmatprep.mubr.f32.mxu0 0.0
    %128 = vmatmul.mubr.f32.gmra.mrb[0].mxu0 %v58
    %v129 = vpop.f32.mrb[0].mxu0
    %v130 = vadd.f32 %v54, %v129
    %v131 = vpop.f32.mrb[0].mxu0
    %132 = vmatprep.mubr.f32.mxu0 0.0
    %133 = vmatmul.mubr.f32.gmra.mrb[0].mxu0 %v61
    %v134 = vpop.f32.mrb[0].mxu0
    %v135 = vadd.f32 %v54, %v134
    %v136 = vpop.f32.mrb[0].mxu0
    %137 = vdwg.mxu0
    %vm138 = vcmask 392192
    %139 = vst.msk [vmem:[#allocation7] sm:$0xff] %vm138, %v130
    %140 = vst.msk [vmem:[#allocation7 + $0x8] sm:$0xff] %vm138, %v135
    // Predicated region
    $region22: #{_affine_forward.1} parent=1 // pred_check
      _
    $region23: #{_affine_forward.1} parent=1 // pred_check_branch
      %142 = sbr.rel (0) target = $region25
    $region24: #{_affine_forward.1} parent=1 // pred_region
      %s144 = ssub.s32 256, 256
      %145 = vsyncadd [#allocation4], %s144
      %s146 = sshll.u32 [#allocation7], 4
      %s147 = int_to_ptr.vmem [resolvable:$true] %s146
      %152 = dma.vmem_to_hbm [thread:$0]  %s147, 256, %s3, [#allocation4], 128, 128, 8
    $region25: #{_affine_forward.1} parent=1 // pred_fallthru
      _
    // Predicated region
    $region26: #{_affine_forward.1} parent=1 // pred_check
      _
    $region27: #{_affine_forward.1} parent=1 // pred_check_branch
      %154 = sbr.rel (0) target = $region29
    $region28: #{_affine_forward.1} parent=1 // pred_region
      %155 = dma.done [#allocation4], 256
    $region29: #{_affine_forward.1} parent=1 // pred_fallthru
      _
    %156 = vsyncpa [#allocation3], 1
    %157 = vsyncpa [#allocation6], 1
    %158 = vsyncpa [#allocation4], 1

</llo_original>
